<compile_context>
chip_gen: v7x
topology: tpu7x:2x2x1
jax: 0.10.0
libtpu: 0.0.40
codegen_flags: <defaults>
</compile_context>

<pallas_src>
import functools

import jax
import jax.numpy as jnp
from jax.experimental import pallas as pl
from jax.experimental.pallas import tpu as pltpu

_MIN_VAL = 1e-06

_VMEM_BUDGET = 48 * 1024 * 1024          # keeps headroom under v7x's 64 MiB/TC
_SINGLE_BUFFER_THRESHOLD = 1 << 20       # below this the double-buffer waste is noise


# --------------------------------------------------------------------------
# Kernels
# --------------------------------------------------------------------------
def _lng_kernel_grouped(x_ref, w_ref, b_ref, out_ref):
    """Single (TM, 4C) grouped output; columns are [mu | v | alpha | beta]."""
    x = x_ref[...].astype(w_ref.dtype)                     # in-kernel bf16 cast (VPU, free under DMA)
    y = jnp.dot(x, w_ref[...], preferred_element_type=jnp.float32)   # MXU, f32 acc
    y = y + b_ref[...]                                      # (TM, 4C) f32

    c = out_ref.shape[-1] // 4
    col = jax.lax.broadcasted_iota(jnp.int32, y.shape, dimension=1)
    is_mu = col < c
    is_alpha = (col >= 2 * c) & (col < 3 * c)

    sp = jnp.logaddexp(y, 0.0)                              # stable softplus (EUP)
    offset = jnp.where(is_alpha, 1.0 + _MIN_VAL, _MIN_VAL)
    out_ref[...] = jnp.where(is_mu, y, sp + offset).astype(out_ref.dtype)


def _lng_kernel_split(x_ref, w_ref, b_ref, mu_ref, v_ref, al_ref, be_ref):
    """Four lane-dense (TM, C) outputs (requires C % 128 == 0)."""
    x = x_ref[...].astype(w_ref.dtype)
    y = jnp.dot(x, w_ref[...], preferred_element_type=jnp.float32)
    y = y + b_ref[...]

    c = mu_ref.shape[-1]
    softplus = lambda t: jnp.logaddexp(t, 0.0)
    # Column slices fall on 128-lane-aligned boundaries -> no VMEM copies;
    # the mu columns bypass the softplus entirely.
    mu_ref[...] = y[:, 0 * c:1 * c].astype(mu_ref.dtype)
    v_ref[...] = (softplus(y[:, 1 * c:2 * c]) + _MIN_VAL).astype(v_ref.dtype)
    al_ref[...] = (softplus(y[:, 2 * c:3 * c]) + 1.0 + _MIN_VAL).astype(al_ref.dtype)
    be_ref[...] = (softplus(y[:, 3 * c:4 * c]) + _MIN_VAL).astype(be_ref.dtype)


# --------------------------------------------------------------------------
# Parameter preparation (hoisted out of the per-call path)
# --------------------------------------------------------------------------
def prepare_params(weight, bias, out_channels, param_dtype=jnp.bfloat16):
    """weight: (4*C, IN) torch nn.Linear layout; bias: (4*C,).

    Returns w_g: (IN, 4*C) in `param_dtype`, b_g: (1, 4*C) f32, with columns
    regrouped so column j*C + c corresponds to torch column 4*c + j (i.e. the
    .view(B, -1, 4) split becomes four contiguous width-C column groups).
    """
    C = out_channels
    IN = weight.shape[1]
    assert weight.shape == (4 * C, IN)
    w_t = weight.T                                               # (IN, 4C)
    w_g = w_t.reshape(IN, C, 4).transpose(0, 2, 1).reshape(IN, 4 * C)
    b_g = bias.reshape(C, 4).transpose(1, 0).reshape(1, 4 * C)
    return w_g.astype(param_dtype), b_g.astype(jnp.float32)


# --------------------------------------------------------------------------
# Tiling / spec planning
# --------------------------------------------------------------------------
def _round_up(n, m):
    return ((n + m - 1) // m) * m


def _resident_specs(in_features, four_c, w_itemsize):
    """Specs for the VMEM-resident weight/bias (constant block index)."""
    if in_features * four_c * w_itemsize >= _SINGLE_BUFFER_THRESHOLD:
        # Constant index_map => never re-fetched; single-buffer to reclaim
        # VMEM headroom for larger TM / larger IN.
        w_spec = pl.BlockSpec((in_features, four_c), lambda i: (0, 0),
                              pipeline_mode=pl.Buffered(1))
        b_spec = pl.BlockSpec((1, four_c), lambda i: (0, 0),
                              pipeline_mode=pl.Buffered(1))
        return w_spec, b_spec, True
    w_spec = pl.BlockSpec((in_features, four_c), lambda i: (0, 0))
    b_spec = pl.BlockSpec((1, four_c), lambda i: (0, 0))
    return w_spec, b_spec, False


def _plan_tiles(batch, in_features, c, x_itemsize, w_itemsize, single_buf_w):
    """Pick TM and an explicit vmem_limit_bytes from the actual buffer sizes."""
    four_c = 4 * c
    w_bufs = 1 if single_buf_w else 2
    w_bytes = w_bufs * (in_features * four_c * w_itemsize + four_c * 4)

    tm = 512
    while tm > 8:
        need = 2 * tm * in_features * x_itemsize + w_bytes + 2 * tm * four_c * 4
        if need <= _VMEM_BUDGET:
            break
        tm //= 2
    tm = min(tm, _round_up(batch, 8))

    need = 2 * tm * in_features * x_itemsize + w_bytes + 2 * tm * four_c * 4
    vmem_limit = int(min(max(need + (need >> 2) + (2 << 20), 32 << 20), 60 << 20))
    return tm, vmem_limit


# --------------------------------------------------------------------------
# Wrapper
# --------------------------------------------------------------------------
@functools.partial(jax.jit, static_argnames=("out_channels",))
def linear_normal_gamma_apply(x, w_g, b_g, out_channels):
    """x: (B, IN), native dtype; w_g/b_g from prepare_params.

    Returns (mu, v, alpha, beta), each (B, C) float32.
    """
    B, IN = x.shape
    C = out_channels
    four_c = 4 * C
    assert w_g.shape == (IN, four_c)

    x_itemsize = jnp.dtype(x.dtype).itemsize
    w_itemsize = jnp.dtype(w_g.dtype).itemsize

    w_spec, b_spec, single_buf_w = _resident_specs(IN, four_c, w_itemsize)
    TM, vmem_limit = _plan_tiles(B, IN, C, x_itemsize, w_itemsize, single_buf_w)
    grid = (pl.cdiv(B, TM),)                 # partial last block handled by Pallas

    x_spec = pl.BlockSpec((TM, IN), lambda i: (i, 0))        # pipelined x tiles (native dtype)

    cost = pl.CostEstimate(
        flops=2 * B * IN * four_c,
        transcendentals=2 * B * 3 * C,                       # exp+log per softplus (3 heads)
        bytes_accessed=(B * IN * x_itemsize
                        + IN * four_c * w_itemsize
                        + four_c * 4
                        + B * four_c * 4),
    )
    cparams = pltpu.CompilerParams(
        dimension_semantics=("parallel",),
        vmem_limit_bytes=vmem_limit,
    )

    if C % 128 == 0:
        # Lane-aligned heads: four lane-dense outputs, no wrapper re-slicing.
        mu, v, alpha, beta = pl.pallas_call(
            _lng_kernel_split,
            grid=grid,
            in_specs=[x_spec, w_spec, b_spec],
            out_specs=[pl.BlockSpec((TM, C), lambda i: (i, 0))] * 4,
            out_shape=[jax.ShapeDtypeStruct((B, C), jnp.float32)] * 4,
            compiler_params=cparams,
            cost_estimate=cost,
        )(x, w_g, b_g)
        return mu, v, alpha, beta

    # Small / unaligned C: single lane-dense grouped slab; the wrapper slices
    # are negligible traffic at this size (and fuse when inlined in a caller jit).
    y = pl.pallas_call(
        _lng_kernel_grouped,
        grid=grid,
        in_specs=[x_spec, w_spec, b_spec],
        out_specs=pl.BlockSpec((TM, four_c), lambda i: (i, 0)),
        out_shape=jax.ShapeDtypeStruct((B, four_c), jnp.float32),
        compiler_params=cparams,
        cost_estimate=cost,
    )(x, w_g, b_g)
    return (y[:, 0 * C:1 * C], y[:, 1 * C:2 * C],
            y[:, 2 * C:3 * C], y[:, 3 * C:4 * C])


def linear_normal_gamma(x, weight, bias, out_channels):
    """Convenience: torch-layout params -> (mu, v, alpha, beta)."""
    w_g, b_g = prepare_params(weight, bias, out_channels)
    return linear_normal_gamma_apply(x, w_g, b_g, out_channels)


# --------------------------------------------------------------------------
# Pure-JAX reference (mirrors the PyTorch forward; inputs rounded through
# bf16 to match the kernel's MXU feed).
# --------------------------------------------------------------------------
def _reference(x, weight, bias, out_channels):
    xr = x.astype(jnp.bfloat16).astype(jnp.float32)
    wr = weight.astype(jnp.bfloat16).astype(jnp.float32)
    pred = xr @ wr.T + bias                                      # (B, 4C)
    pred = pred.reshape(x.shape[0], -1, 4)                       # (B, C, 4)
    mu, logv, logalpha, logbeta = [pred[..., j] for j in range(4)]
    sp = lambda t: jnp.logaddexp(t, 0.0)
    m = _MIN_VAL
    return mu, sp(logv) + m, sp(logalpha) + m + 1.0, sp(logbeta) + m


if __name__ == "__main__":
    key = jax.random.PRNGKey(0)
    k1, k2 = jax.random.split(key)

    def make_case(k, B, IN, C):
        kx, kw, kb = jax.random.split(k, 3)
        bound = 1.0 / (IN ** 0.5)   # nn.Linear default init range
        x = jax.random.normal(kx, (B, IN), dtype=jnp.float32)
        weight = jax.random.uniform(kw, (4 * C, IN), minval=-bound, maxval=bound,
                                    dtype=jnp.float32)
        bias = jax.random.uniform(kb, (4 * C,), minval=-bound, maxval=bound,
                                  dtype=jnp.float32)
        return x, weight, bias

    # Case 1: tiny head (C=16 -> grouped-slab path) with an awkward batch
    #         (B=10 -> exercises cdiv grid + partial last block).
    # Case 2: lane-aligned head (C=128 -> four-output split path).
    for k, B, IN, C in ((k1, 10, 32, 16), (k2, 8, 32, 128)):
        x, weight, bias = make_case(k, B, IN, C)
        outs = linear_normal_gamma(x, weight, bias, C)
        outs = jax.block_until_ready(outs)
        refs = _reference(x, weight, bias, C)
        for o, r in zip(outs, refs):
            assert o.shape == (B, C)
            assert jnp.allclose(o, r, atol=1e-4, rtol=1e-4), \
                float(jnp.max(jnp.abs(o - r)))

    print("KERNEL_OK")
</pallas_src>

<mosaic_0001>
module attributes {stable_mosaic.version = 11 : i64} {
  func.func @_lng_kernel_grouped(%arg0: i32, %arg1: memref<16x32xf32, #tpu.memory_space<vmem>>, %arg2: memref<32x64xbf16, #tpu.memory_space<vmem>>, %arg3: memref<1x64xf32, #tpu.memory_space<vmem>>, %arg4: memref<16x64xf32, #tpu.memory_space<vmem>>) attributes {dimension_semantics = [#tpu.dimension_semantics<parallel>], iteration_bounds = array<i64: 1>, scalar_prefetch = 0 : i64, scratch_operands = 0 : i64, tpu.core_type = #tpu.core_type<tc>, window_params = [{transform_indices = @transform_0, window_bounds = array<i64: 16, 32>}, {pipeline_mode = #tpu.pipeline_mode<synchronous>, transform_indices = @transform_1, window_bounds = array<i64: 32, 64>}, {pipeline_mode = #tpu.pipeline_mode<synchronous>, transform_indices = @transform_2, window_bounds = array<i64: 1, 64>}, {transform_indices = @transform_3, window_bounds = array<i64: 16, 64>}]} {
    %c0 = arith.constant 0 : index
    %c0_0 = arith.constant 0 : index
    %0 = vector.load %arg1[%c0, %c0_0] : memref<16x32xf32, #tpu.memory_space<vmem>>, vector<16x32xf32>
    %1 = arith.truncf %0 : vector<16x32xf32> to vector<16x32xbf16>
    %c0_1 = arith.constant 0 : index
    %c0_2 = arith.constant 0 : index
    %2 = vector.load %arg2[%c0_1, %c0_2] : memref<32x64xbf16, #tpu.memory_space<vmem>>, vector<32x64xbf16>
    %cst = arith.constant dense<0.000000e+00> : vector<16x64xf32>
    %3 = tpu.matmul %1, %2, %cst {dimension_numbers = #tpu.dot_dimension_numbers<[1], [0], [0], [1], [0, 0, 1, 1], [], []>} : vector<16x32xbf16>, vector<32x64xbf16>, vector<16x64xf32> -> vector<16x64xf32>
    %c0_3 = arith.constant 0 : index
    %c0_4 = arith.constant 0 : index
    %4 = vector.load %arg3[%c0_3, %c0_4] : memref<1x64xf32, #tpu.memory_space<vmem>>, vector<1x64xf32>
    %5 = vector.broadcast %4 : vector<1x64xf32> to vector<16x64xf32>
    %6 = arith.addf %3, %5 : vector<16x64xf32>
    %7 = tpu.iota {dimensions = array<i32: 1>} : vector<16x64xi32>
    %c16_i32 = arith.constant 16 : i32
    %8 = vector.broadcast %c16_i32 : i32 to vector<16x64xi32>
    %9 = arith.cmpi slt, %7, %8 : vector<16x64xi32>
    %c32_i32 = arith.constant 32 : i32
    %10 = vector.broadcast %c32_i32 : i32 to vector<16x64xi32>
    %11 = arith.cmpi sge, %7, %10 : vector<16x64xi32>
    %c48_i32 = arith.constant 48 : i32
    %12 = vector.broadcast %c48_i32 : i32 to vector<16x64xi32>
    %13 = arith.cmpi slt, %7, %12 : vector<16x64xi32>
    %14 = arith.andi %11, %13 : vector<16x64xi1>
    %cst_5 = arith.constant 0.000000e+00 : f32
    %15 = vector.broadcast %cst_5 : f32 to vector<16x64xf32>
    %16 = arith.maximumf %6, %15 : vector<16x64xf32>
    %17 = vector.broadcast %cst_5 : f32 to vector<16x64xf32>
    %18 = arith.subf %6, %17 : vector<16x64xf32>
    %19 = arith.cmpf one, %18, %18 : vector<16x64xf32>
    %20 = vector.broadcast %cst_5 : f32 to vector<16x64xf32>
    %21 = arith.addf %6, %20 : vector<16x64xf32>
    %22 = math.absf %18 : vector<16x64xf32>
    %cst_6 = arith.constant 0.000000e+00 : f32
    %23 = vector.broadcast %cst_6 : f32 to vector<16x64xf32>
    %24 = arith.subf %23, %22 : vector<16x64xf32>
    %25 = math.exp %24 : vector<16x64xf32>
    %26 = math.log1p %25 : vector<16x64xf32>
    %27 = arith.addf %16, %26 : vector<16x64xf32>
    %28 = arith.select %19, %21, %27 : vector<16x64xi1>, vector<16x64xf32>
    %cst_7 = arith.constant 1.00000095 : f32
    %cst_8 = arith.constant 9.99999997E-7 : f32
    %29 = vector.broadcast %cst_7 : f32 to vector<16x64xf32>
    %30 = vector.broadcast %cst_8 : f32 to vector<16x64xf32>
    %31 = arith.select %14, %29, %30 : vector<16x64xi1>, vector<16x64xf32>
    %32 = arith.addf %28, %31 : vector<16x64xf32>
    %33 = arith.select %9, %6, %32 : vector<16x64xi1>, vector<16x64xf32>
    %c0_9 = arith.constant 0 : index
    %c0_10 = arith.constant 0 : index
    %34 = vector.load %arg4[%c0_9, %c0_10] : memref<16x64xf32, #tpu.memory_space<vmem>>, vector<16x64xf32>
    tpu.vector_store %arg4[%c0_9, %c0_10], %33 {strides = array<i32>} : memref<16x64xf32, #tpu.memory_space<vmem>>, vector<16x64xf32>,
    return
  }
  func.func @transform_0(%arg0: i32) -> (i32, i32) {
    %c0_i32 = arith.constant 0 : i32
    %c0_i32_0 = arith.constant 0 : i32
    return %arg0, %c0_i32 : i32, i32
  }
  func.func @transform_1(%arg0: i32) -> (i32, i32) {
    %c0_i32 = arith.constant 0 : i32
    %c0_i32_0 = arith.constant 0 : i32
    %c0_i32_1 = arith.constant 0 : i32
    return %c0_i32, %c0_i32_0 : i32, i32
  }
  func.func @transform_2(%arg0: i32) -> (i32, i32) {
    %c0_i32 = arith.constant 0 : i32
    %c0_i32_0 = arith.constant 0 : i32
    %c0_i32_1 = arith.constant 0 : i32
    return %c0_i32, %c0_i32_0 : i32, i32
  }
  func.func @transform_3(%arg0: i32) -> (i32, i32) {
    %c0_i32 = arith.constant 0 : i32
    %c0_i32_0 = arith.constant 0 : i32
    return %arg0, %c0_i32 : i32, i32
  }
}

</mosaic_0001>

<llo_original>
// kernel: linear_normal_gamma_apply.1
$region0: #{linear_normal_gamma_apply.1}
  #allocation0 [shape = 'u32[]', space=smem, size = 0x4, offset = 0x4, fixed_abs, tag = 'smem constant byte address 0x4 - core index']
  #allocation1 [shape = 'u32[144,128]{1,0:T(1,128)}', space=vmem, size = 0x12000, scoped, tag = 'internal scratch']
  %s0 = inlined_call_operand.hbm [shape: f32[10,32], index: 0, kind: input, shape index: {}]
  %s1 = inlined_call_operand.hbm [shape: bf16[32,64], index: 1, kind: input, shape index: {}]
  %s2 = inlined_call_operand.vmem [shape: f32[1,64], index: 2, kind: input, shape index: {}]
  %s3 = inlined_call_operand.vmem [shape: f32[10,64], index: 3, kind: output, shape index: {}]
  %s4 = sld [smem:[#allocation0]]
  $region30: #{linear_normal_gamma_apply.1} parent=0
    _
  %s6 = ssub.s32 1, %s4
  %s7 = scalar_select 0, %s6, %s4
  $region1: #{linear_normal_gamma_apply.1} parent=0
    #allocation2 [shape = 'u8[8192]{0}', space=vmem, size = 0x2000, scoped, tag = 'input window, operand 0, single buffered']
    #allocation3 [shape = 's32[1]{0}', space=sflag, size = 0x4, scoped, tag = 'scoped memory for linear_normal_gamma_apply.1']
    #allocation4 [shape = 'u8[8192]{0}', space=vmem, size = 0x2000, scoped, tag = 'input window, operand 1, single buffered']
    #allocation5 [shape = 's32[1]{0}', space=sflag, size = 0x4, scoped, tag = 'scoped memory for linear_normal_gamma_apply.1']
    %8 = vsyncpa [#allocation3], 0
    %9 = vsyncpa [#allocation5], 0
    // Predicated region
    $region2: #{linear_normal_gamma_apply.1} parent=1 // pred_check
      _
    $region3: #{linear_normal_gamma_apply.1} parent=1 // pred_check_branch
      %11 = sbr.rel (0) target = $region5
    $region4: #{linear_normal_gamma_apply.1} parent=1 // pred_region
      %s13 = ssub.s32 256, 256
      %14 = vsyncadd [#allocation3], %s13
      %s15 = sshll.u32 [#allocation2], 4
      %s16 = int_to_ptr.vmem [resolvable:$true] %s15
      %21 = dma.hbm_to_vmem [thread:$0]  %s0, 256, %s16, [#allocation3], 128, 128, 8
    $region5: #{linear_normal_gamma_apply.1} parent=1 // pred_fallthru
      _
    // Predicated region
    $region6: #{linear_normal_gamma_apply.1} parent=1 // pred_check
      _
    $region7: #{linear_normal_gamma_apply.1} parent=1 // pred_check_branch
      %23 = sbr.rel (0) target = $region9
    $region8: #{linear_normal_gamma_apply.1} parent=1 // pred_region
      %s25 = ssub.s32 256, 256
      %26 = vsyncadd [#allocation5], %s25
      %s27 = sshll.u32 [#allocation4], 4
      %s28 = int_to_ptr.vmem [resolvable:$true] %s27
      %33 = dma.hbm_to_vmem [thread:$0]  %s1, 256, %s28, [#allocation5], 64, 64, 4
    $region9: #{linear_normal_gamma_apply.1} parent=1 // pred_fallthru
      _
    // Predicated region
    $region10: #{linear_normal_gamma_apply.1} parent=1 // pred_check
      _
    $region11: #{linear_normal_gamma_apply.1} parent=1 // pred_check_branch
      %35 = sbr.rel (0) target = $region13
    $region12: #{linear_normal_gamma_apply.1} parent=1 // pred_region
      _
    $region13: #{linear_normal_gamma_apply.1} parent=1 // pred_fallthru
      _
    // Predicated region
    $region14: #{linear_normal_gamma_apply.1} parent=1 // pred_check
      _
    $region15: #{linear_normal_gamma_apply.1} parent=1 // pred_check_branch
      %37 = sbr.rel (0) target = $region17
    $region16: #{linear_normal_gamma_apply.1} parent=1 // pred_region
      %38 = dma.done [#allocation3], 256
    $region17: #{linear_normal_gamma_apply.1} parent=1 // pred_fallthru
      _
    // Predicated region
    $region18: #{linear_normal_gamma_apply.1} parent=1 // pred_check
      _
    $region19: #{linear_normal_gamma_apply.1} parent=1 // pred_check_branch
      %40 = sbr.rel (0) target = $region21
    $region20: #{linear_normal_gamma_apply.1} parent=1 // pred_region
      %41 = dma.done [#allocation5], 256
    $region21: #{linear_normal_gamma_apply.1} parent=1 // pred_fallthru
      _
    %v43 = vld [vmem:[#allocation2] sm:$0xff]
    %v44 = vld [vmem:[#allocation2 + $0x8] sm:$0xff]
    %v45 = vpack.c.bf16 %v44, %v43
    %v46 = vld [vmem:[#allocation4] sm:$0xf]
    %v47 = vld [vmem:[#allocation4 + $0x4] sm:$0xf]
    %v48 = vld [vmem:[#allocation4 + $0x8] sm:$0xf]
    %v49 = vld [vmem:[#allocation4 + $0xc] sm:$0xf]
    %v50 = vld [vmem:[%s2] sm:$0x1]
    %v52 = vlaneseq
    %v53 = vshrl.u32 %v52, 7
    %v54 = vsub.s32 0, %v53
    %v55 = vrot.slane %v50, %v54
    %v61 = vunpack.c.l.b16 %v46
    %v62 = vunpack.c.l.b16 %v47
    %v63 = vunpack.c.l.b16 %v48
    %v64 = vunpack.c.l.b16 %v49
    %v65 = vpack.c.b16 %v62, %v61
    %v66 = vpack.c.b16 %v64, %v63
    %vm69 = vcmask 261120
    %v71 = vsel %vm69, %v45, 0
    %73 = vmatprep.subr.bf16.mxu0 0
    %74 = vmatpush1.bf16.msra.mxu0 %v65
    %75 = vmatprep.subr.bf16.mxu0 0
    %76 = vmatpush1.bf16.msra.mxu0 %v66
    %77 = vmatprep.subr.bf16.mxu0 0
    %78 = vmatpush1.bf16.msra.mxu0 0
    %79 = vmatprep.subr.bf16.mxu0 0
    %80 = vmatpush1.bf16.msra.mxu0 0
    %81 = vmatprep.subr.bf16.mxu0 0
    %82 = vmatpush1.bf16.msra.mxu0 0
    %83 = vmatprep.subr.bf16.mxu0 0
    %84 = vmatpush1.bf16.msra.mxu0 0
    %85 = vmatprep.subr.bf16.mxu0 0
    %86 = vmatpush1.bf16.msra.mxu0 0
    %87 = vmatprep.subr.bf16.mxu0 0
    %88 = vmatpush1.bf16.msra.mxu0 0
    %89 = vmatprep.subr.bf16.mxu0 0
    %90 = vmatpush1.bf16.msra.mxu0 0
    %91 = vmatprep.subr.bf16.mxu0 0
    %92 = vmatpush1.bf16.msra.mxu0 0
    %93 = vmatprep.subr.bf16.mxu0 0
    %94 = vmatpush1.bf16.msra.mxu0 0
    %95 = vmatprep.subr.bf16.mxu0 0
    %96 = vmatpush1.bf16.msra.mxu0 0
    %97 = vmatprep.subr.bf16.mxu0 0
    %98 = vmatpush1.bf16.msra.mxu0 0
    %99 = vmatprep.subr.bf16.mxu0 0
    %100 = vmatpush1.bf16.msra.mxu0 0
    %101 = vmatprep.subr.bf16.mxu0 0
    %102 = vmatpush1.bf16.msra.mxu0 0
    %103 = vmatprep.subr.bf16.mxu0 0
    %104 = vmatpush1.bf16.msra.mxu0 0
    %105 = vmatprep.mubr.bf16.mxu0 0
    %106 = vmatmul.mubr.bf16.gmra.mrb[0].mxu0 %v71
    %v107 = vpop.f32.mrb[0].mxu0
    %v108 = vadd.f32 %v55, %v107
    %v109 = vpop.f32.mrb[0].mxu0
    %v110 = vpop.f32.mrb[0].mxu0
    %v111 = vadd.f32 %v55, %v110
    %v112 = vpop.f32.mrb[0].mxu0
    %113 = vdwg.mxu0
    %v114 = vlaneseq
    %v115 = vand.u32 %v114, 127
    %vm116 = vcmp.lt.s32.totalorder %v115, 16
    %vm117 = vcmp.ge.s32.totalorder %v115, 32
    %vm118 = vcmp.lt.s32.totalorder %v115, 48
    %vm119 = vmand %vm117, %vm118
    %v120 = vmax.f32 %v108, 0.0
    %v121 = vmax.f32 %v111, 0.0
    %vm122 = vcmp.ne.f32.partialorder %v108, %v108
    %vm123 = vcmp.ne.f32.partialorder %v111, %v111
    %v124 = vadd.f32 %v108, 0.0
    %v125 = vadd.f32 %v111, 0.0
    %v126 = vand.u32 2147483647, %v108
    %v127 = vand.u32 2147483647, %v111
    %v128 = vsub.f32 0.0, %v126
    %v129 = vsub.f32 0.0, %v127
    %v130 = vmul.f32 %v128, 1.442695
    %v131 = vpow.pop %v130
    %v132 = vmul.f32 %v129, 1.442695
    %v133 = vpow.pop %v132
    %v134 = vadd.f32 %v131, 1.0
    %v135 = vlog2.pop %v134
    %v136 = vmul.f32 %v135, 0.6931472
    %v137 = vmul.f32 -0.5, %v131
    %v138 = vadd.f32 %v137, 1.0
    %v139 = vmul.f32 %v138, %v131
    %v140 = vand.u32 2147483647, %v131
    %vm141 = vcmp.lt.f32.partialorder %v140, 0.0004427343
    %v142 = vsel %vm141, %v139, %v136
    %v143 = vadd.f32 %v133, 1.0
    %v144 = vlog2.pop %v143
    %v145 = vmul.f32 %v144, 0.6931472
    %v146 = vmul.f32 -0.5, %v133
    %v147 = vadd.f32 %v146, 1.0
    %v148 = vmul.f32 %v147, %v133
    %v149 = vand.u32 2147483647, %v133
    %vm150 = vcmp.lt.f32.partialorder %v149, 0.0004427343
    %v151 = vsel %vm150, %v148, %v145
    %v152 = vadd.f32 %v120, %v142
    %v153 = vadd.f32 %v121, %v151
    %v154 = vsel %vm122, %v124, %v152
    %v155 = vsel %vm123, %v125, %v153
    %v156 = vsel %vm119, 1.000001, 1e-06
    %v157 = vadd.f32 %v154, %v156
    %v158 = vadd.f32 %v155, %v156
    %v159 = vsel %vm116, %v108, %v157
    %v160 = vsel %vm116, %v111, %v158
    %vm161 = vcmask 523264
    %162 = vst.msk [vmem:[%s3] sm:$0xff] %vm161, %v159
    %163 = vst.msk [vmem:[%s3 + $0x8] sm:$0xff] %vm161, %v160
    // Predicated region
    $region22: #{linear_normal_gamma_apply.1} parent=1 // pred_check
      _
    $region23: #{linear_normal_gamma_apply.1} parent=1 // pred_check_branch
      %165 = sbr.rel (0) target = $region25
    $region24: #{linear_normal_gamma_apply.1} parent=1 // pred_region
      _
    $region25: #{linear_normal_gamma_apply.1} parent=1 // pred_fallthru
      _
    // Predicated region
    $region26: #{linear_normal_gamma_apply.1} parent=1 // pred_check
      _
    $region27: #{linear_normal_gamma_apply.1} parent=1 // pred_check_branch
      %167 = sbr.rel (0) target = $region29
    $region28: #{linear_normal_gamma_apply.1} parent=1 // pred_region
      _
    $region29: #{linear_normal_gamma_apply.1} parent=1 // pred_fallthru
      _
    %168 = vsyncpa [#allocation3], 1
    %169 = vsyncpa [#allocation5], 1

</llo_original>
